<compile_context>
chip_gen: v7x
topology: tpu7x:2x2x1
jax: 0.10.0
libtpu: 0.0.40
codegen_flags: <defaults>
</compile_context>

<pallas_src>
import jax
import jax.numpy as jnp
from jax.experimental import pallas as pl
from jax.experimental.pallas import tpu as pltpu


def _round_up(a, b):
    return (a + b - 1) // b * b


def _cdiv(a, b):
    return (a + b - 1) // b


def _vmem_capacity_bytes():
    # Best-effort hardware query; conservative fallback if unavailable.
    try:
        return int(getattr(pltpu.get_tpu_info(), "vmem_capacity_bytes",
                           64 * 1024 * 1024))
    except Exception:
        return 64 * 1024 * 1024


def convt_bn_lrelu_kernel(w_ref, b_ref, x_ref, o_ref):
    """Fused ConvTranspose2d(k=2,s=2) + folded BatchNorm + LeakyReLU(0.1).

    w_ref: (K, Cin)   = (kh,kw,c)-ordered weight columns, BN scale pre-folded.
    b_ref: (K, 1)     = per-(kh,kw,c) folded BN bias.
    x_ref: (1, Cin, P) pixel tile of one image (channel-major, lane = pixel).
    o_ref: (1, K, P)   lane-dense output tile (channel-major, lane = pixel).
    """
    y = jnp.dot(w_ref[...], x_ref[0], preferred_element_type=jnp.float32)
    z = y + b_ref[...]                       # lane-broadcast bias
    o_ref[0] = jnp.maximum(z, 0.1 * z)       # LeakyReLU(0.1)


def up_forward(x_nchw, weight, gamma, beta, eps=1e-5):
    N, Cin, H, W = x_nchw.shape
    Cout = weight.shape[1]
    K = 4 * Cout                 # (kh, kw, c) outputs per input pixel
    HW = H * W
    M = N * HW

    x_v = x_nchw.reshape(N, Cin, HW).astype(jnp.float32)

    # ---- BatchNorm batch statistics via Gram-matrix identities (tiny XLA) ----
    # y_p = W^T x_p  =>  sum_p y = W^T colsum(x),  sum_p y^2 = diag(W^T (x x^T) W)
    w_t = jnp.transpose(weight, (2, 3, 1, 0)).reshape(K, Cin).astype(jnp.float32)
    colsum = jnp.sum(x_v, axis=(0, 2))                       # (Cin,)
    gram = jnp.einsum("nip,njp->ij", x_v, x_v)               # (Cin, Cin)
    count = jnp.float32(4 * M)                               # N * 2H * 2W per channel
    ch_sum = (w_t @ colsum).reshape(2, 2, Cout).sum(axis=(0, 1))
    ch_ssum = ((w_t @ gram) * w_t).sum(axis=1).reshape(2, 2, Cout).sum(axis=(0, 1))
    mean = ch_sum / count
    # TODO(synk): E[y^2]-E[y]^2 in f32 can cancel badly if activations are far
    # off-center; a centered second moment would need one more streaming read of x.
    var = jnp.maximum(ch_ssum / count - mean * mean, 0.0)
    scale = gamma / jnp.sqrt(var + eps)                      # (Cout,)
    bias = beta - mean * scale

    # Fold the BN scale into the weight rows; keep a per-row bias.
    w_scaled = w_t * jnp.tile(scale, 4)[:, None]             # (K, Cin)
    bias_rows = jnp.tile(bias, 4).reshape(K, 1)              # (K, 1)

    # ---- tile sizing (accurate VMEM accounting, chip-adaptive, >=4 blocks) ----
    cap = _vmem_capacity_bytes()
    vmem_limit = int(min(max(cap * 3 // 4, 32 * 1024 * 1024), 64 * 1024 * 1024))
    budget = int(vmem_limit * 0.55)          # headroom for compiler scratch
    fixed = 2 * (K * Cin + K) * 4            # weight + bias (double buffered)
    per_pixel = (2 * Cin + 3 * K) * 4        # x block x2, out block x2, f32 y temp
    p_tile = max(128, (max(budget - fixed, per_pixel * 128) // per_pixel) // 128 * 128)
    p_tile = min(p_tile, _round_up(HW, 128))
    # keep >= ~4 blocks in flight (2 TensorCores on v7x + DMA pipeline overlap),
    # and rebalance so remainder padding stays below one 128-lane granule/block.
    nb_min = min(_cdiv(4, N), max(1, HW // 128))
    nb = max(_cdiv(HW, p_tile), nb_min)
    p_tile = max(128, _round_up(_cdiv(HW, nb), 128))
    nb = _cdiv(HW, p_tile)
    HW_pad = nb * p_tile
    if HW_pad != HW:
        # zero pixels: their outputs are sliced off; stats already computed above.
        x_v = jnp.pad(x_v, ((0, 0), (0, 0), (0, HW_pad - HW)))

    grid = (N, nb)
    out_k = pl.pallas_call(
        convt_bn_lrelu_kernel,
        out_shape=jax.ShapeDtypeStruct((N, K, HW_pad), jnp.float32),
        grid_spec=pltpu.PrefetchScalarGridSpec(
            num_scalar_prefetch=0,
            grid=grid,
            in_specs=[
                pl.BlockSpec((K, Cin), lambda n, p: (0, 0)),
                pl.BlockSpec((K, 1), lambda n, p: (0, 0)),
                pl.BlockSpec((1, Cin, p_tile), lambda n, p: (n, 0, p)),
            ],
            out_specs=pl.BlockSpec((1, K, p_tile), lambda n, p: (n, 0, p)),
        ),
        compiler_params=pltpu.CompilerParams(
            dimension_semantics=("parallel", "parallel"),
            vmem_limit_bytes=vmem_limit,
        ),
    )(w_scaled, bias_rows, x_v)

    # ---- 2x2 sub-pixel interleave + NCHW: ONE fused XLA transpose ----
    # TODO(synk): removing this last relayout needs an in-kernel lane/sublane
    # interleave (stride-2 stores) whose Mosaic lowering is not robust; it is
    # kept as a single XLA transpose, the only non-kernel pass over the output.
    out = out_k[:, :, :HW].reshape(N, 2, 2, Cout, H, W)
    out = jnp.transpose(out, (0, 3, 4, 1, 5, 2)).reshape(N, Cout, 2 * H, 2 * W)
    return out


def up_reference(x_nchw, weight, gamma, beta, eps=1e-5):
    """Pure-JAX reference of the identical math (for self-check)."""
    N, Cin, H, W = x_nchw.shape
    Cout = weight.shape[1]
    x_nhwc = jnp.transpose(x_nchw, (0, 2, 3, 1))
    # out[n,h,w,kh,kw,co] = sum_i x[n,h,w,i] * W[i,co,kh,kw]
    y = jnp.einsum("nhwi,ickl->nhwklc", x_nhwc, weight)
    y = jnp.transpose(y, (0, 1, 3, 2, 4, 5)).reshape(N, 2 * H, 2 * W, Cout)
    mean = y.mean(axis=(0, 1, 2))
    var = ((y - mean) ** 2).mean(axis=(0, 1, 2))
    z = (y - mean) / jnp.sqrt(var + eps) * gamma + beta
    z = jnp.where(z > 0, z, 0.1 * z)
    return jnp.transpose(z, (0, 3, 1, 2))


if __name__ == "__main__":
    key = jax.random.PRNGKey(0)
    k_x, k_w, k_g, k_b = jax.random.split(key, 4)

    N, in_c, out_c, H, W = 2, 4, 8, 16, 16
    x = jax.random.normal(k_x, (N, in_c, H, W), dtype=jnp.float32)
    # ConvTranspose2d weight shape: (in_c, out_c, kH, kW)
    weight = jax.random.normal(k_w, (in_c, out_c, 2, 2), dtype=jnp.float32) * 0.1
    gamma = 1.0 + 0.1 * jax.random.normal(k_g, (out_c,), dtype=jnp.float32)
    beta = 0.1 * jax.random.normal(k_b, (out_c,), dtype=jnp.float32)

    out = up_forward(x, weight, gamma, beta)
    out = jax.block_until_ready(out)

    ref = jax.block_until_ready(up_reference(x, weight, gamma, beta))
    assert out.shape == (N, out_c, 2 * H, 2 * W)
    assert jnp.allclose(out, ref, atol=2e-4, rtol=2e-4), float(jnp.abs(out - ref).max())

    print("KERNEL_OK")
</pallas_src>

<mosaic_0001>
module attributes {stable_mosaic.version = 11 : i64} {
  func.func @convt_bn_lrelu_kernel(%arg0: i32, %arg1: i32, %arg2: memref<32x4xf32, #tpu.memory_space<vmem>>, %arg3: memref<32x1xf32, #tpu.memory_space<vmem>>, %arg4: memref<1x4x128xf32, #tpu.memory_space<vmem>>, %arg5: memref<1x32x128xf32, #tpu.memory_space<vmem>>) attributes {dimension_semantics = [#tpu.dimension_semantics<parallel>, #tpu.dimension_semantics<parallel>], iteration_bounds = array<i64: 2, 2>, scalar_prefetch = 0 : i64, scratch_operands = 0 : i64, tpu.core_type = #tpu.core_type<tc>, window_params = [{pipeline_mode = #tpu.pipeline_mode<synchronous>, transform_indices = @transform_0, window_bounds = array<i64: 32, 4>}, {pipeline_mode = #tpu.pipeline_mode<synchronous>, transform_indices = @transform_1, window_bounds = array<i64: 32, 1>}, {transform_indices = @transform_2, window_bounds = array<i64: 1, 4, 128>}, {transform_indices = @transform_3, window_bounds = array<i64: 1, 32, 128>}]} {
    %c0 = arith.constant 0 : index
    %c0_0 = arith.constant 0 : index
    %0 = vector.load %arg2[%c0, %c0_0] : memref<32x4xf32, #tpu.memory_space<vmem>>, vector<32x4xf32>
    %c0_1 = arith.constant 0 : index
    %c0_2 = arith.constant 0 : index
    %c0_3 = arith.constant 0 : index
    %1 = vector.load %arg4[%c0_1, %c0_2, %c0_3] : memref<1x4x128xf32, #tpu.memory_space<vmem>>, vector<1x4x128xf32>
    %2 = vector.shape_cast %1 : vector<1x4x128xf32> to vector<4x128xf32>
    %cst = arith.constant dense<0.000000e+00> : vector<32x128xf32>
    %3 = tpu.matmul %0, %2, %cst {dimension_numbers = #tpu.dot_dimension_numbers<[1], [0], [0], [1], [0, 0, 1, 1], [], []>} : vector<32x4xf32>, vector<4x128xf32>, vector<32x128xf32> -> vector<32x128xf32>
    %c0_4 = arith.constant 0 : index
    %c0_5 = arith.constant 0 : index
    %4 = vector.load %arg3[%c0_4, %c0_5] : memref<32x1xf32, #tpu.memory_space<vmem>>, vector<32x1xf32>
    %5 = vector.broadcast %4 : vector<32x1xf32> to vector<32x128xf32>
    %6 = arith.addf %3, %5 : vector<32x128xf32>
    %cst_6 = arith.constant 1.000000e-01 : f32
    %7 = vector.broadcast %cst_6 : f32 to vector<32x128xf32>
    %8 = arith.mulf %7, %6 : vector<32x128xf32>
    %9 = arith.maximumf %6, %8 : vector<32x128xf32>
    %c0_7 = arith.constant 0 : index
    %c0_8 = arith.constant 0 : index
    %c0_9 = arith.constant 0 : index
    %10 = vector.load %arg5[%c0_7, %c0_8, %c0_9] : memref<1x32x128xf32, #tpu.memory_space<vmem>>, vector<1x32x128xf32>
    %11 = vector.shape_cast %10 : vector<1x32x128xf32> to vector<32x128xf32>
    %12 = vector.shape_cast %9 : vector<32x128xf32> to vector<1x32x128xf32>
    tpu.vector_store %arg5[%c0_7, %c0_8, %c0_9], %12 {strides = array<i32>} : memref<1x32x128xf32, #tpu.memory_space<vmem>>, vector<1x32x128xf32>,
    return
  }
  func.func @transform_0(%arg0: i32, %arg1: i32) -> (i32, i32) {
    %c0_i32 = arith.constant 0 : i32
    %c0_i32_0 = arith.constant 0 : i32
    %c0_i32_1 = arith.constant 0 : i32
    return %c0_i32, %c0_i32_0 : i32, i32
  }
  func.func @transform_1(%arg0: i32, %arg1: i32) -> (i32, i32) {
    %c0_i32 = arith.constant 0 : i32
    %c0_i32_0 = arith.constant 0 : i32
    %c0_i32_1 = arith.constant 0 : i32
    return %c0_i32, %c0_i32_0 : i32, i32
  }
  func.func @transform_2(%arg0: i32, %arg1: i32) -> (i32, i32, i32) {
    %c0_i32 = arith.constant 0 : i32
    %c0_i32_0 = arith.constant 0 : i32
    return %arg0, %c0_i32, %arg1 : i32, i32, i32
  }
  func.func @transform_3(%arg0: i32, %arg1: i32) -> (i32, i32, i32) {
    %c0_i32 = arith.constant 0 : i32
    %c0_i32_0 = arith.constant 0 : i32
    return %arg0, %c0_i32, %arg1 : i32, i32, i32
  }
}

</mosaic_0001>

<llo_original>
// kernel: tpu_custom_call.1
$region0: #{tpu_custom_call.1}
  #allocation0 [shape = 'u32[]', space=smem, size = 0x4, offset = 0x4, fixed_abs, tag = 'smem constant byte address 0x4 - core index']
  #allocation1 [shape = 'u32[144,128]{1,0:T(1,128)}', space=vmem, size = 0x12000, scoped, tag = 'internal scratch']
  %s0 = inlined_call_operand.vmem [shape: f32[32,4], index: 0, kind: input, shape index: {}]
  %s1 = inlined_call_operand.vmem [shape: f32[32,1], index: 1, kind: input, shape index: {}]
  %s2 = inlined_call_operand.vmem [shape: f32[2,4,256], index: 2, kind: input, shape index: {}]
  %s3 = inlined_call_operand.hbm [shape: f32[2,32,256], index: 3, kind: output, shape index: {}]
  %s4 = sld [smem:[#allocation0]]
  $region45: #{tpu_custom_call.1} parent=0
    _
  %s6 = ssub.s32 1, %s4
  %s7 = scalar_select 0, %s6, %s4
  $region1: #{tpu_custom_call.1} parent=0
    #allocation2 [shape = 'u8[32768]{0}', space=vmem, size = 0x8000, scoped, tag = 'output window, operand 0']
    #allocation3 [shape = 's32[2]{0}', space=sflag, size = 0x8, scoped, tag = 'scoped memory for tpu_custom_call.1']
    %8 = vsyncpa [#allocation3], 0
    %s9 = scalar_lea.sflag [#allocation3], 1
    %10 = vsyncpa %s9, 0
    loop: start=0, step=1, limit=6
    $region2: #{tpu_custom_call.1} parent=1 // loop_pre_header
      _
    $region3: #{tpu_custom_call.1} parent=1 // loop_header
      %s12 = sphi 0, %s16
      %p13 = scmp.ge.s32.totalorder %s12, 6
      %s19 = sphi 0, %s31
      %s20 = sphi 0, %s27
      %s21 = sphi 0, %s19
      %s22 = sphi 0, %s20
      %s23 = sphi 0, %s21
      %s24 = sphi 0, %s22
      %s32 = sphi 0, %s32
      %s34 = sphi 0, %s32
      %s35 = sphi 0, %s34
      %s49 = sphi 0, %s35
      %s53 = sphi 0, %s53
      %s55 = sphi 0, %s53
      %s56 = sphi 0, %s55
      %s70 = sphi 0, %s56
      %s78 = sphi 0, %s80
      %s81 = sphi 0, %s78
      %s82 = sphi 0, %s81
      %s98 = sphi 0, %s82
      %s106 = sphi 0, %s108
      %s109 = sphi 0, %s106
      %s110 = sphi 0, %s109
      %s126 = sphi 0, %s110
    $region4: #{tpu_custom_call.1} parent=1 // loop_header_branch
      %15 = sbr.rel (%p13) target = $region8
    $region5: #{tpu_custom_call.1} parent=1 // loop_body
      %s17 = ssub.s32 %s12, 1
      %s18 = ssub.s32 %s12, 2
      %s25 = sadd.s32 1, %s20
      %p26 = scmp.ge.s32.totalorder %s25, 2
      %s27 = scalar_select %p26, 0, %s25
      %s28 = sadd.s32 1, %s19
      %s29 = scalar_select %p26, %s28, %s19
      %p30 = scmp.ge.s32.totalorder %s29, 2
      %s31 = scalar_select %p30, 0, %s29
      %s33 = sadd.s32 %s32, 1
      %p36 = scmp.eq.s32.totalorder %s12, 3
      %p37 = scmp.ne.s32.totalorder %s32, %s34
      %p38 = scmp.eq.s32.totalorder %s12, 0
      %p39 = por %p37, %p38
      %p40 = scmp.ne.s32.totalorder %s32, %s34
      %p41 = scmp.eq.s32.totalorder %s17, 3
      %p42 = por %p40, %p41
      %p43 = scmp.ne.s32.totalorder %s34, %s35
      %p44 = scmp.eq.s32.totalorder %s17, 0
      %p45 = por %p43, %p44
      %p46 = scmp.ne.s32.totalorder %s34, %s35
      %p47 = scmp.eq.s32.totalorder %s18, 3
      %p48 = por %p46, %p47
      %p50 = scmp.ne.s32.totalorder %s35, %s49
      %p51 = scmp.eq.s32.totalorder %s18, 0
      %p52 = por %p50, %p51
      %s54 = sadd.s32 %s53, 1
      %p57 = scmp.eq.s32.totalorder %s12, 3
      %p58 = scmp.ne.s32.totalorder %s53, %s55
      %p59 = scmp.eq.s32.totalorder %s12, 0
      %p60 = por %p58, %p59
      %p61 = scmp.ne.s32.totalorder %s53, %s55
      %p62 = scmp.eq.s32.totalorder %s17, 3
      %p63 = por %p61, %p62
      %p64 = scmp.ne.s32.totalorder %s55, %s56
      %p65 = scmp.eq.s32.totalorder %s17, 0
      %p66 = por %p64, %p65
      %p67 = scmp.ne.s32.totalorder %s55, %s56
      %p68 = scmp.eq.s32.totalorder %s18, 3
      %p69 = por %p67, %p68
      %p71 = scmp.ne.s32.totalorder %s56, %s70
      %p72 = scmp.eq.s32.totalorder %s18, 0
      %p73 = por %p71, %p72
      %s74 = ssub.s32 %s19, %s31
      %s75 = ssub.s32 %s20, %s27
      %s76 = sor.u32 %s74, %s75
      %p77 = scmp.eq.s32.totalorder %s76, 0
      %s79 = sadd.s32 %s78, 1
      %s80 = scalar_select %p77, %s78, %s79
      %p83 = pneg %p77
      %p84 = scmp.eq.s32.totalorder %s12, 3
      %p85 = por %p83, %p84
      %p86 = scmp.ne.s32.totalorder %s78, %s81
      %p87 = scmp.eq.s32.totalorder %s12, 0
      %p88 = por %p86, %p87
      %p89 = scmp.ne.s32.totalorder %s78, %s81
      %p90 = scmp.eq.s32.totalorder %s17, 3
      %p91 = por %p89, %p90
      %p92 = scmp.ne.s32.totalorder %s81, %s82
      %p93 = scmp.eq.s32.totalorder %s17, 0
      %p94 = por %p92, %p93
      %p95 = scmp.ne.s32.totalorder %s81, %s82
      %p96 = scmp.eq.s32.totalorder %s18, 3
      %p97 = por %p95, %p96
      %p99 = scmp.ne.s32.totalorder %s82, %s98
      %p100 = scmp.eq.s32.totalorder %s18, 0
      %p101 = por %p99, %p100
      %s102 = ssub.s32 %s19, %s31
      %s103 = ssub.s32 %s20, %s27
      %s104 = sor.u32 %s102, %s103
      %p105 = scmp.eq.s32.totalorder %s104, 0
      %s107 = sadd.s32 %s106, 1
      %s108 = scalar_select %p105, %s106, %s107
      %p111 = pneg %p105
      %p112 = scmp.eq.s32.totalorder %s12, 3
      %p113 = por %p111, %p112
      %p114 = scmp.ne.s32.totalorder %s106, %s109
      %p115 = scmp.eq.s32.totalorder %s12, 0
      %p116 = por %p114, %p115
      %p117 = scmp.ne.s32.totalorder %s106, %s109
      %p118 = scmp.eq.s32.totalorder %s17, 3
      %p119 = por %p117, %p118
      %p120 = scmp.ne.s32.totalorder %s109, %s110
      %p121 = scmp.eq.s32.totalorder %s17, 0
      %p122 = por %p120, %p121
      %p123 = scmp.ne.s32.totalorder %s109, %s110
      %p124 = scmp.eq.s32.totalorder %s18, 3
      %p125 = por %p123, %p124
      %p127 = scmp.ne.s32.totalorder %s110, %s126
      %p128 = scmp.eq.s32.totalorder %s18, 0
      %p129 = por %p127, %p128
      %p130 = scmp.le.s32.totalorder 1, %s12
      %p131 = scmp.lt.s32.totalorder %s12, 5
      %p132 = pnand %p130, %p131
      %p133 = pneg %p132
      // Predicated region
      $region9: #{tpu_custom_call.1} parent=5 // pred_check
        _
      $region10: #{tpu_custom_call.1} parent=5 // pred_check_branch
        %135 = sbr.rel (%p132) target = $region12
      $region11: #{tpu_custom_call.1} parent=5 // pred_region
        %s136 = ssub.s32 %s12, 1
        // Predicated region
        $region13: #{tpu_custom_call.1} parent=11 // pred_check
          %p137 = pneg %p45
        $region14: #{tpu_custom_call.1} parent=11 // pred_check_branch
          %139 = sbr.rel (%p137) target = $region16
        $region15: #{tpu_custom_call.1} parent=11 // pred_region
          _
        $region16: #{tpu_custom_call.1} parent=11 // pred_fallthru
          _
        // Predicated region
        $region17: #{tpu_custom_call.1} parent=11 // pred_check
          %p140 = pneg %p66
        $region18: #{tpu_custom_call.1} parent=11 // pred_check_branch
          %142 = sbr.rel (%p140) target = $region20
        $region19: #{tpu_custom_call.1} parent=11 // pred_region
          _
        $region20: #{tpu_custom_call.1} parent=11 // pred_fallthru
          _
      $region12: #{tpu_custom_call.1} parent=5 // pred_fallthru
        _
      %p143 = scmp.lt.s32.totalorder %s12, 4
      // Predicated region
      $region21: #{tpu_custom_call.1} parent=5 // pred_check
        %p144 = pneg %p143
      $region22: #{tpu_custom_call.1} parent=5 // pred_check_branch
        %146 = sbr.rel (%p144) target = $region24
      $region23: #{tpu_custom_call.1} parent=5 // pred_region
        // Predicated region
        $region25: #{tpu_custom_call.1} parent=23 // pred_check
          %p147 = pneg %p88
        $region26: #{tpu_custom_call.1} parent=23 // pred_check_branch
          %149 = sbr.rel (%p147) target = $region28
        $region27: #{tpu_custom_call.1} parent=23 // pred_region
          %p150 = scmp.lt.s32.totalorder %s19, 1
          %s151 = scalar_select %p150, %s19, 1
          %p152 = scmp.lt.s32.totalorder %s20, 1
          %s153 = scalar_select %p152, %s20, 1
          %s154 = smul.addr %s151, 2
          %s155 = sadd.s32 %s153, %s154
          %s156 = smul.addr %s155, 4
          %s157 = scalar_lea.vmem %s2, %s156
        $region28: #{tpu_custom_call.1} parent=23 // pred_fallthru
          _
      $region24: #{tpu_custom_call.1} parent=5 // pred_fallthru
        _
      %p158 = scmp.le.s32.totalorder 1, %s12
      %p159 = scmp.lt.s32.totalorder %s12, 5
      %p160 = pnand %p158, %p159
      %p161 = pneg %p160
      // Predicated region
      $region29: #{tpu_custom_call.1} parent=5 // pred_check
        _
      $region30: #{tpu_custom_call.1} parent=5 // pred_check_branch
        %163 = sbr.rel (%p160) target = $region32
      $region31: #{tpu_custom_call.1} parent=5 // pred_region
        %s164 = ssub.s32 %s12, 1
        %p165 = pneg %p45
        %p166 = pneg %p42
        %p167 = pneg %p66
        %p168 = pneg %p63
        %p169 = scmp.lt.s32.totalorder %s21, 1
        %s170 = scalar_select %p169, %s21, 1
        %p171 = scmp.lt.s32.totalorder %s22, 1
        %s172 = scalar_select %p171, %s22, 1
        %s173 = smul.addr %s170, 2
        %s174 = sadd.s32 %s172, %s173
        %s175 = smul.addr %s174, 4
        %s176 = scalar_lea.vmem %s2, %s175
        %p177 = pneg %p94
        %p178 = pneg %p91
        %p179 = pneg %p122
        %p180 = pneg %p119
        %s181 = sand.u32 %s109, 1
        %s182 = scalar_lea.sflag [#allocation3], %s181
        %s183 = sand.u32 %s109, 1
        %s184 = smul.addr %s183, 32
        %s185 = scalar_lea.vmem [#allocation2], %s184
        %p186 = scmp.lt.s32.totalorder %s21, 1
        %s187 = scalar_select %p186, %s21, 1
        %p188 = scmp.lt.s32.totalorder %s22, 1
        %s189 = scalar_select %p188, %s22, 1
        %s190 = smul.addr %s187, 2
        %s191 = sadd.s32 %s189, %s190
        %s192 = smul.addr %s191, 4
        %s193 = scalar_lea.vmem %s2, %s192
        %v194 = vld [vmem:[%s0] sm:$0xff]
        %v195 = vld [vmem:[%s0 + $0x8] sm:$0xff]
        %v196 = vld [vmem:[%s0 + $0x10] sm:$0xff]
        %v197 = vld [vmem:[%s0 + $0x18] sm:$0xff]
        %v198 = vld [vmem:[%s193] sm:$0xf]
        %v199 = vld [vmem:[%s1] sm:$0xff]
        %v200 = vld [vmem:[%s1 + $0x8] sm:$0xff]
        %v201 = vld [vmem:[%s1 + $0x10] sm:$0xff]
        %v202 = vld [vmem:[%s1 + $0x18] sm:$0xff]
        %204 = vset.pattern.permute.xlu0 0
        %205 = vperm.xlu0 %204, %v199
        %v206 = vpop.permute.xlu0 %205
        %209 = vset.pattern.permute.xlu0 0
        %210 = vperm.xlu0 %209, %v200
        %v211 = vpop.permute.xlu0 %210
        %214 = vset.pattern.permute.xlu0 0
        %215 = vperm.xlu0 %214, %v201
        %v216 = vpop.permute.xlu0 %215
        %219 = vset.pattern.permute.xlu0 0
        %220 = vperm.xlu0 %219, %v202
        %v221 = vpop.permute.xlu0 %220
        %vm223 = vcmask 31744
        %v225 = vsel %vm223, %v194, 0
        %v228 = vsel %vm223, %v195, 0
        %v231 = vsel %vm223, %v196, 0
        %v234 = vsel %vm223, %v197, 0
        %vm236 = vcmask 1043456
        %v238 = vsel %vm236, %v198, 0
        %240 = vmatprep.subr.mxu0 0.0
        %241 = vmatpush1.msra.mxu0 %v238
        %242 = vmatprep.subr.mxu0 0.0
        %243 = vmatpush1.msra.mxu0 0.0
        %244 = vmatprep.subr.mxu0 0.0
        %245 = vmatpush1.msra.mxu0 0.0
        %246 = vmatprep.subr.mxu0 0.0
        %247 = vmatpush1.msra.mxu0 0.0
        %248 = vmatprep.subr.mxu0 0.0
        %249 = vmatpush1.msra.mxu0 0.0
        %250 = vmatprep.subr.mxu0 0.0
        %251 = vmatpush1.msra.mxu0 0.0
        %252 = vmatprep.subr.mxu0 0.0
        %253 = vmatpush1.msra.mxu0 0.0
        %254 = vmatprep.subr.mxu0 0.0
        %255 = vmatpush1.msra.mxu0 0.0
        %256 = vmatprep.subr.mxu0 0.0
        %257 = vmatpush1.msra.mxu0 0.0
        %258 = vmatprep.subr.mxu0 0.0
        %259 = vmatpush1.msra.mxu0 0.0
        %260 = vmatprep.subr.mxu0 0.0
        %261 = vmatpush1.msra.mxu0 0.0
        %262 = vmatprep.subr.mxu0 0.0
        %263 = vmatpush1.msra.mxu0 0.0
        %264 = vmatprep.subr.mxu0 0.0
        %265 = vmatpush1.msra.mxu0 0.0
        %266 = vmatprep.subr.mxu0 0.0
        %267 = vmatpush1.msra.mxu0 0.0
        %268 = vmatprep.subr.mxu0 0.0
        %269 = vmatpush1.msra.mxu0 0.0
        %270 = vmatprep.subr.mxu0 0.0
        %271 = vmatpush1.msra.mxu0 0.0
        %272 = vmatprep.subr.mxu0 0.0
        %273 = vmatpush1.msra.mxu0 0.0
        %274 = vmatprep.subr.mxu0 0.0
        %275 = vmatpush1.msra.mxu0 0.0
        %276 = vmatprep.subr.mxu0 0.0
        %277 = vmatpush1.msra.mxu0 0.0
        %278 = vmatprep.subr.mxu0 0.0
        %279 = vmatpush1.msra.mxu0 0.0
        %280 = vmatprep.subr.mxu0 0.0
        %281 = vmatpush1.msra.mxu0 0.0
        %282 = vmatprep.subr.mxu0 0.0
        %283 = vmatpush1.msra.mxu0 0.0
        %284 = vmatprep.subr.mxu0 0.0
        %285 = vmatpush1.msra.mxu0 0.0
        %286 = vmatprep.subr.mxu0 0.0
        %287 = vmatpush1.msra.mxu0 0.0
        %288 = vmatprep.subr.mxu0 0.0
        %289 = vmatpush1.msra.mxu0 0.0
        %290 = vmatprep.subr.mxu0 0.0
        %291 = vmatpush1.msra.mxu0 0.0
        %292 = vmatprep.subr.mxu0 0.0
        %293 = vmatpush1.msra.mxu0 0.0
        %294 = vmatprep.subr.mxu0 0.0
        %295 = vmatpush1.msra.mxu0 0.0
        %296 = vmatprep.subr.mxu0 0.0
        %297 = vmatpush1.msra.mxu0 0.0
        %298 = vmatprep.subr.mxu0 0.0
        %299 = vmatpush1.msra.mxu0 0.0
        %300 = vmatprep.subr.mxu0 0.0
        %301 = vmatpush1.msra.mxu0 0.0
        %302 = vmatprep.subr.mxu0 0.0
        %303 = vmatpush1.msra.mxu0 0.0
        %304 = vmatprep.mubr.f32.mxu0 0.0
        %305 = vmatmul.mubr.f32.gmra.mrb[0].mxu0 %v225
        %v306 = vpop.f32.mrb[0].mxu0
        %v307 = vadd.f32 %v206, %v306
        %v308 = vpop.f32.mrb[0].mxu0
        %309 = vmatprep.mubr.f32.mxu0 0.0
        %310 = vmatmul.mubr.f32.gmra.mrb[0].mxu0 %v228
        %v311 = vpop.f32.mrb[0].mxu0
        %v312 = vadd.f32 %v211, %v311
        %v313 = vpop.f32.mrb[0].mxu0
        %314 = vmatprep.mubr.f32.mxu0 0.0
        %315 = vmatmul.mubr.f32.gmra.mrb[0].mxu0 %v231
        %v316 = vpop.f32.mrb[0].mxu0
        %v317 = vadd.f32 %v216, %v316
        %v318 = vpop.f32.mrb[0].mxu0
        %319 = vmatprep.mubr.f32.mxu0 0.0
        %320 = vmatmul.mubr.f32.gmra.mrb[0].mxu0 %v234
        %v321 = vpop.f32.mrb[0].mxu0
        %v322 = vadd.f32 %v221, %v321
        %v323 = vpop.f32.mrb[0].mxu0
        %324 = vdwg.mxu0
        %v325 = vmul.f32 %v307, 0.1
        %v326 = vmul.f32 %v312, 0.1
        %v327 = vmul.f32 %v317, 0.1
        %v328 = vmul.f32 %v322, 0.1
        %v329 = vmax.f32 %v307, %v325
        %v330 = vmax.f32 %v312, %v326
        %v331 = vmax.f32 %v317, %v327
        %v332 = vmax.f32 %v322, %v328
        %333 = vst [vmem:[%s185] sm:$0xff] %v329
        %334 = vst [vmem:[%s185 + $0x8] sm:$0xff] %v330
        %335 = vst [vmem:[%s185 + $0x10] sm:$0xff] %v331
        %336 = vst [vmem:[%s185 + $0x18] sm:$0xff] %v332
        %s337 = sand.u32 %s109, 1
        %s338 = scalar_lea.sflag [#allocation3], %s337
        %s339 = sand.u32 %s109, 1
        %s340 = smul.addr %s339, 32
        %s341 = scalar_lea.vmem [#allocation2], %s340
        // Predicated region
        $region33: #{tpu_custom_call.1} parent=31 // pred_check
          %p342 = pneg %p119
        $region34: #{tpu_custom_call.1} parent=31 // pred_check_branch
          %344 = sbr.rel (%p342) target = $region36
        $region35: #{tpu_custom_call.1} parent=31 // pred_region
          %s346 = ssub.s32 512, 512
          %347 = vsyncadd %s338, %s346
          %s348 = smul.addr %s21, 8
          %s349 = sadd.s32 %s22, %s348
          %s350 = smul.addr %s349, 128
          %s351 = scalar_lea.hbm %s3, %s350
          %s352 = sshll.u32 %s341, 4
          %s353 = int_to_ptr.vmem [resolvable:$true] %s352
          %358 = dma.vmem_to_hbm [thread:$0]  %s353, 512, %s351, %s338, 128, 256, 8
        $region36: #{tpu_custom_call.1} parent=31 // pred_fallthru
          _
      $region32: #{tpu_custom_call.1} parent=5 // pred_fallthru
        _
      %p359 = scmp.le.s32.totalorder 2, %s12
      // Predicated region
      $region37: #{tpu_custom_call.1} parent=5 // pred_check
        %p360 = pneg %p359
      $region38: #{tpu_custom_call.1} parent=5 // pred_check_branch
        %362 = sbr.rel (%p360) target = $region40
      $region39: #{tpu_custom_call.1} parent=5 // pred_region
        %s363 = ssub.s32 %s12, 2
        // Predicated region
        $region41: #{tpu_custom_call.1} parent=39 // pred_check
          %p364 = pneg %p125
        $region42: #{tpu_custom_call.1} parent=39 // pred_check_branch
          %366 = sbr.rel (%p364) target = $region44
        $region43: #{tpu_custom_call.1} parent=39 // pred_region
          %s367 = sand.u32 %s110, 1
          %s368 = scalar_lea.sflag [#allocation3], %s367
          %s369 = sand.u32 %s110, 1
          %s370 = smul.addr %s369, 32
          %s371 = scalar_lea.vmem [#allocation2], %s370
          %372 = dma.done %s368, 512
        $region44: #{tpu_custom_call.1} parent=39 // pred_fallthru
          _
      $region40: #{tpu_custom_call.1} parent=5 // pred_fallthru
        _
    $region6: #{tpu_custom_call.1} parent=1 // loop_footer
      %s16 = sadd.s32 1, %s12
    $region7: #{tpu_custom_call.1} parent=1 // loop_footer_branch
      %11 = sbr.rel target = $region3
    $region8: #{tpu_custom_call.1} parent=1 // loop_exit
      _
    %373 = vsyncpa [#allocation3], 1
    %s374 = scalar_lea.sflag [#allocation3], 1
    %375 = vsyncpa %s374, 1

</llo_original>
